<compile_context>
chip_gen: v6e
topology: v6e:2x2x1
jax: 0.10.0
libtpu: 0.0.40
codegen_flags: <defaults>
</compile_context>

<pallas_src>
import jax
import jax.numpy as jnp
from jax.experimental import pallas as pl
from jax.experimental.pallas import tpu as pltpu

# ----------------------------- configuration ------------------------------
T = 2              # number of diagram types (keys of inputs.diagms)
Q = 8              # q (self.dim), theta.shape[0]
B = 2              # batch of graphs
PMAX = 16          # max #points per diagram (padding of ragged diagrams)
WW = 16            # width_weight_fn
WF = 32            # width_final_mlp
NGF = 4            # num_graph_features
NUM_CLASSES = 3
SIGMA = 0.1


# --------------------------- fused forward kernel ---------------------------
def perslay_fused_kernel(diags_ref,        # VMEM (T, B, PMAX, 2)
                         poolw_ref,        # VMEM (T, B, PMAX, 1)  = mask / count
                         theta_t_ref,      # VMEM (2, Q)           theta^T
                         w1_ref, b1_ref,   # VMEM (2, WW), (1, WW)
                         w2t_ref, b2_ref,  # VMEM (1, WW), (1, 1)
                         gf_ref,           # VMEM (B, NGF)
                         rw1t_ref,         # VMEM (T, Q, WF)   rho layer-1 (topo part)
                         rw1g_ref,         # VMEM (NGF, WF)    rho layer-1 (graph-feat part)
                         rb1_ref,          # VMEM (1, WF)
                         rw2_ref, rb2_ref, # VMEM (WF, C), (1, C)
                         out_ref):         # VMEM (B, C)
    # --- invariant loads, hoisted out of the (unrolled) diagram-type loop ---
    thx = theta_t_ref[0:1, :]              # (1, Q)   theta[:, 0]
    thy = theta_t_ref[1:2, :]              # (1, Q)   theta[:, 1]
    w1_0 = w1_ref[0:1, :]                  # (1, WW)
    w1_1 = w1_ref[1:2, :]                  # (1, WW)
    b1 = b1_ref[...]                       # (1, WW)
    w2t = w2t_ref[...]                     # (1, WW)
    b2 = b2_ref[...]                       # (1, 1)
    inv_2s2 = 1.0 / (2.0 * SIGMA * SIGMA)

    # rho first-layer pre-activation; start with graph-feature branch + bias.
    pre = jnp.dot(gf_ref[...], rw1g_ref[...],
                  preferred_element_type=jnp.float32) + rb1_ref[...]        # (B, WF)

    for t in range(T):                     # static unroll over diagram types
        d = diags_ref[t]                   # (B, PMAX, 2)
        dx = d[:, :, 0:1]                  # (B, PMAX, 1)  birth
        dy = d[:, :, 1:2]                  # (B, PMAX, 1)  death

        # weight MLP: Linear(2,WW)->ReLU->Linear(WW,1)->Sigmoid, on VPU/XLU only
        h = jnp.maximum(dx * w1_0 + dy * w1_1 + b1, 0.0)                    # (B, PMAX, WW)
        wgt = jax.nn.sigmoid(jnp.sum(h * w2t, axis=-1, keepdims=True) + b2)  # (B, PMAX, 1)

        # gaussian point transform: exp(-||d - theta||^2 / (2 sigma^2)), VPU + EUP
        dist2 = (dx - thx) ** 2 + (dy - thy) ** 2                           # (B, PMAX, Q)
        rep = jnp.exp(-dist2 * inv_2s2) * wgt                               # (B, PMAX, Q)

        # masked mean pool over valid points (weights = mask/count, host-made)
        pooled = jnp.sum(rep * poolw_ref[t], axis=1)                        # (B, Q)

        # fold this type's topo block straight into rho layer 1 (replaces concat)
        pre = pre + jnp.dot(pooled, rw1t_ref[t], preferred_element_type=jnp.float32)

    hidden = jnp.maximum(pre, 0.0)                                          # (B, WF)
    out_ref[...] = jnp.dot(hidden, rw2_ref[...],
                           preferred_element_type=jnp.float32) + rb2_ref[...]


# --------------------------------- wrapper ----------------------------------
def perslay_forward(diags, counts, theta, w1, b1, w2, b2, gf, rw1, rb1, rw2, rb2):
    # Host-side glue: pure layout prep (transposes / splits / pooling weights).
    theta_t = theta.T                                          # (2, Q)
    w2t = w2.T                                                 # (1, WW)
    rw1t = rw1[:T * Q].reshape(T, Q, WF)                       # (T, Q, WF)
    rw1g = rw1[T * Q:]                                         # (NGF, WF)
    # masked-mean pooling weights; clamp count >= 1 so empty diagrams give 0, not NaN
    mask = (jnp.arange(PMAX, dtype=jnp.int32)[None, None, :] < counts[:, :, None])
    poolw = (mask.astype(jnp.float32)
             / jnp.maximum(counts, 1).astype(jnp.float32)[:, :, None])[..., None]  # (T,B,PMAX,1)

    vmem = pl.BlockSpec(memory_space=pltpu.MemorySpace.VMEM)
    return pl.pallas_call(
        perslay_fused_kernel,
        out_shape=jax.ShapeDtypeStruct((B, NUM_CLASSES), jnp.float32),
        in_specs=[vmem] * 13,
        out_specs=vmem,
    )(diags, poolw, theta_t, w1, b1, w2t, b2, gf, rw1t, rw1g, rb1, rw2, rb2)


# ---------------------------- pure-JAX reference ---------------------------
def perslay_reference(diags, counts, theta, w1, b1, w2, b2, gf, rw1, rb1, rw2, rb2):
    outs = []
    for t in range(T):
        d = diags[t]                                                     # (B, PMAX, 2)
        h = jnp.maximum(jnp.einsum('bpi,ij->bpj', d, w1) + b1, 0.0)
        wgt = jax.nn.sigmoid(jnp.einsum('bpi,ij->bpj', h, w2) + b2)      # (B, PMAX, 1)
        dist2 = jnp.sum((d[:, :, None, :] - theta[None, None, :, :]) ** 2, axis=-1)
        rep = jnp.exp(-dist2 / (2.0 * SIGMA * SIGMA)) * wgt
        mask = (jnp.arange(PMAX)[None, :, None] < counts[t][:, None, None]).astype(jnp.float32)
        pooled = jnp.sum(rep * mask, axis=1) / counts[t][:, None].astype(jnp.float32)
        outs.append(pooled)
    topo = jnp.concatenate(outs, axis=1)
    x = jnp.concatenate([topo, gf], axis=1)
    h = jnp.maximum(x @ rw1 + rb1, 0.0)
    return h @ rw2 + rb2


# ------------------------------ param init ----------------------------------
def linear_params(key, fan_in, fan_out):
    kw, kb = jax.random.split(key)
    bound = 1.0 / jnp.sqrt(jnp.float32(fan_in))
    w = jax.random.uniform(kw, (fan_in, fan_out), jnp.float32, -bound, bound)
    b = jax.random.uniform(kb, (1, fan_out), jnp.float32, -bound, bound)
    return w, b


if __name__ == "__main__":
    key = jax.random.PRNGKey(0)
    ks = jax.random.split(key, 8)

    # parameters (deterministic, synthetic)
    theta = jax.random.normal(ks[0], (Q, 2), jnp.float32)          # torch.randn(q, 2)
    w1, b1 = linear_params(ks[1], 2, WW)                           # weight fn hidden layer
    w2, b2 = linear_params(ks[2], WW, 1)                           # weight fn output
    rw1, rb1 = linear_params(ks[3], 2 * Q + NGF, WF)               # rho hidden layer
    rw2, rb2 = linear_params(ks[4], WF, NUM_CLASSES)               # rho output

    # inputs
    diags = jax.random.uniform(ks[5], (T, B, PMAX, 2), jnp.float32)        # padded diagrams
    counts = jax.random.randint(ks[6], (T, B), 3, PMAX + 1).astype(jnp.int32)
    gf = jax.random.normal(ks[7], (B, NGF), jnp.float32)                   # inputs.graph_features

    out = perslay_forward(diags, counts, theta, w1, b1, w2, b2, gf, rw1, rb1, rw2, rb2)
    out = jax.block_until_ready(out)

    ref = perslay_reference(diags, counts, theta, w1, b1, w2, b2, gf, rw1, rb1, rw2, rb2)
    assert out.shape == (B, NUM_CLASSES)
    assert jnp.allclose(out, ref, rtol=1e-2, atol=1e-2), "mismatch vs JAX reference"

    # TODO(synk): use_gnn=True branch (external GNN module) is out of scope here.
    print("KERNEL_OK")
</pallas_src>

<mosaic_0001>
module attributes {stable_mosaic.version = 11 : i64} {
  func.func @perslay_fused_kernel(%arg0: memref<2x2x16x2xf32, #tpu.memory_space<vmem>>, %arg1: memref<2x2x16x1xf32, #tpu.memory_space<vmem>>, %arg2: memref<2x8xf32, #tpu.memory_space<vmem>>, %arg3: memref<2x16xf32, #tpu.memory_space<vmem>>, %arg4: memref<1x16xf32, #tpu.memory_space<vmem>>, %arg5: memref<1x16xf32, #tpu.memory_space<vmem>>, %arg6: memref<1x1xf32, #tpu.memory_space<vmem>>, %arg7: memref<2x4xf32, #tpu.memory_space<vmem>>, %arg8: memref<2x8x32xf32, #tpu.memory_space<vmem>>, %arg9: memref<4x32xf32, #tpu.memory_space<vmem>>, %arg10: memref<1x32xf32, #tpu.memory_space<vmem>>, %arg11: memref<32x3xf32, #tpu.memory_space<vmem>>, %arg12: memref<1x3xf32, #tpu.memory_space<vmem>>, %arg13: memref<2x3xf32, #tpu.memory_space<vmem>>) attributes {dimension_semantics = [], scalar_prefetch = 0 : i64, scratch_operands = 0 : i64, tpu.core_type = #tpu.core_type<tc>} {
    %c0 = arith.constant 0 : index
    %c0_0 = arith.constant 0 : index
    %0 = vector.load %arg2[%c0, %c0_0] : memref<2x8xf32, #tpu.memory_space<vmem>>, vector<1x8xf32>
    %c1 = arith.constant 1 : index
    %c0_1 = arith.constant 0 : index
    %1 = vector.load %arg2[%c1, %c0_1] : memref<2x8xf32, #tpu.memory_space<vmem>>, vector<1x8xf32>
    %c0_2 = arith.constant 0 : index
    %c0_3 = arith.constant 0 : index
    %2 = vector.load %arg3[%c0_2, %c0_3] : memref<2x16xf32, #tpu.memory_space<vmem>>, vector<1x16xf32>
    %c1_4 = arith.constant 1 : index
    %c0_5 = arith.constant 0 : index
    %3 = vector.load %arg3[%c1_4, %c0_5] : memref<2x16xf32, #tpu.memory_space<vmem>>, vector<1x16xf32>
    %c0_6 = arith.constant 0 : index
    %c0_7 = arith.constant 0 : index
    %4 = vector.load %arg4[%c0_6, %c0_7] : memref<1x16xf32, #tpu.memory_space<vmem>>, vector<1x16xf32>
    %c0_8 = arith.constant 0 : index
    %c0_9 = arith.constant 0 : index
    %5 = vector.load %arg5[%c0_8, %c0_9] : memref<1x16xf32, #tpu.memory_space<vmem>>, vector<1x16xf32>
    %c0_10 = arith.constant 0 : index
    %c0_11 = arith.constant 0 : index
    %6 = vector.load %arg6[%c0_10, %c0_11] : memref<1x1xf32, #tpu.memory_space<vmem>>, vector<1x1xf32>
    %c0_12 = arith.constant 0 : index
    %c0_13 = arith.constant 0 : index
    %7 = vector.load %arg7[%c0_12, %c0_13] : memref<2x4xf32, #tpu.memory_space<vmem>>, vector<2x4xf32>
    %c0_14 = arith.constant 0 : index
    %c0_15 = arith.constant 0 : index
    %8 = vector.load %arg9[%c0_14, %c0_15] : memref<4x32xf32, #tpu.memory_space<vmem>>, vector<4x32xf32>
    %cst = arith.constant dense<0.000000e+00> : vector<2x32xf32>
    %9 = tpu.matmul %7, %8, %cst {dimension_numbers = #tpu.dot_dimension_numbers<[1], [0], [0], [1], [0, 0, 1, 1], [], []>} : vector<2x4xf32>, vector<4x32xf32>, vector<2x32xf32> -> vector<2x32xf32>
    %c0_16 = arith.constant 0 : index
    %c0_17 = arith.constant 0 : index
    %10 = vector.load %arg10[%c0_16, %c0_17] : memref<1x32xf32, #tpu.memory_space<vmem>>, vector<1x32xf32>
    %11 = vector.broadcast %10 : vector<1x32xf32> to vector<2x32xf32>
    %12 = arith.addf %9, %11 : vector<2x32xf32>
    %c0_18 = arith.constant 0 : index
    %c0_19 = arith.constant 0 : index
    %c0_20 = arith.constant 0 : index
    %c0_21 = arith.constant 0 : index
    %13 = vector.load %arg0[%c0_18, %c0_19, %c0_20, %c0_21] : memref<2x2x16x2xf32, #tpu.memory_space<vmem>>, vector<1x2x16x2xf32>
    %14 = vector.shape_cast %13 : vector<1x2x16x2xf32> to vector<2x16x2xf32>
    %15 = vector.extract_strided_slice %14 {offsets = [0, 0, 0], sizes = [2, 16, 1], strides = [1, 1, 1]} : vector<2x16x2xf32> to vector<2x16x1xf32>
    %16 = vector.extract_strided_slice %14 {offsets = [0, 0, 1], sizes = [2, 16, 1], strides = [1, 1, 1]} : vector<2x16x2xf32> to vector<2x16x1xf32>
    %17 = vector.shape_cast %2 : vector<1x16xf32> to vector<1x1x16xf32>
    %18 = vector.broadcast %15 : vector<2x16x1xf32> to vector<2x16x16xf32>
    %19 = vector.broadcast %17 : vector<1x1x16xf32> to vector<2x16x16xf32>
    %20 = arith.mulf %18, %19 : vector<2x16x16xf32>
    %21 = vector.shape_cast %3 : vector<1x16xf32> to vector<1x1x16xf32>
    %22 = vector.broadcast %16 : vector<2x16x1xf32> to vector<2x16x16xf32>
    %23 = vector.broadcast %21 : vector<1x1x16xf32> to vector<2x16x16xf32>
    %24 = arith.mulf %22, %23 : vector<2x16x16xf32>
    %25 = arith.addf %20, %24 : vector<2x16x16xf32>
    %26 = vector.shape_cast %4 : vector<1x16xf32> to vector<1x1x16xf32>
    %27 = vector.broadcast %26 : vector<1x1x16xf32> to vector<2x16x16xf32>
    %28 = arith.addf %25, %27 : vector<2x16x16xf32>
    %cst_22 = arith.constant 0.000000e+00 : f32
    %29 = vector.broadcast %cst_22 : f32 to vector<2x16x16xf32>
    %30 = arith.maximumf %28, %29 : vector<2x16x16xf32>
    %31 = vector.shape_cast %5 : vector<1x16xf32> to vector<1x1x16xf32>
    %32 = vector.broadcast %31 : vector<1x1x16xf32> to vector<2x16x16xf32>
    %33 = arith.mulf %30, %32 : vector<2x16x16xf32>
    %cst_23 = arith.constant dense<0.000000e+00> : vector<2x16xf32>
    %34 = vector.multi_reduction <add>, %33, %cst_23 [2] : vector<2x16x16xf32> to vector<2x16xf32>
    %35 = vector.shape_cast %34 : vector<2x16xf32> to vector<2x16x1xf32>
    %36 = vector.shape_cast %6 : vector<1x1xf32> to vector<1x1x1xf32>
    %37 = vector.broadcast %36 : vector<1x1x1xf32> to vector<2x16x1xf32>
    %38 = arith.addf %35, %37 : vector<2x16x1xf32>
    %39 = arith.negf %38 : vector<2x16x1xf32>
    %40 = math.exp %39 : vector<2x16x1xf32>
    %cst_24 = arith.constant 1.000000e+00 : f32
    %41 = vector.broadcast %cst_24 : f32 to vector<2x16x1xf32>
    %42 = arith.addf %41, %40 : vector<2x16x1xf32>
    %43 = arith.divf %41, %42 : vector<2x16x1xf32>
    %44 = vector.shape_cast %0 : vector<1x8xf32> to vector<1x1x8xf32>
    %45 = vector.broadcast %15 : vector<2x16x1xf32> to vector<2x16x8xf32>
    %46 = vector.broadcast %44 : vector<1x1x8xf32> to vector<2x16x8xf32>
    %47 = arith.subf %45, %46 : vector<2x16x8xf32>
    %48 = arith.mulf %47, %47 : vector<2x16x8xf32>
    %49 = vector.shape_cast %1 : vector<1x8xf32> to vector<1x1x8xf32>
    %50 = vector.broadcast %16 : vector<2x16x1xf32> to vector<2x16x8xf32>
    %51 = vector.broadcast %49 : vector<1x1x8xf32> to vector<2x16x8xf32>
    %52 = arith.subf %50, %51 : vector<2x16x8xf32>
    %53 = arith.mulf %52, %52 : vector<2x16x8xf32>
    %54 = arith.addf %48, %53 : vector<2x16x8xf32>
    %cst_25 = arith.constant 0.000000e+00 : f32
    %55 = vector.broadcast %cst_25 : f32 to vector<2x16x8xf32>
    %56 = arith.subf %55, %54 : vector<2x16x8xf32>
    %cst_26 = arith.constant 5.000000e+01 : f32
    %57 = vector.broadcast %cst_26 : f32 to vector<2x16x8xf32>
    %58 = arith.mulf %56, %57 : vector<2x16x8xf32>
    %59 = math.exp %58 : vector<2x16x8xf32>
    %60 = vector.broadcast %43 : vector<2x16x1xf32> to vector<2x16x8xf32>
    %61 = arith.mulf %59, %60 : vector<2x16x8xf32>
    %c0_27 = arith.constant 0 : index
    %c0_28 = arith.constant 0 : index
    %c0_29 = arith.constant 0 : index
    %c0_30 = arith.constant 0 : index
    %62 = vector.load %arg1[%c0_27, %c0_28, %c0_29, %c0_30] : memref<2x2x16x1xf32, #tpu.memory_space<vmem>>, vector<1x2x16x1xf32>
    %63 = vector.shape_cast %62 : vector<1x2x16x1xf32> to vector<2x16x1xf32>
    %64 = vector.broadcast %63 : vector<2x16x1xf32> to vector<2x16x8xf32>
    %65 = arith.mulf %61, %64 : vector<2x16x8xf32>
    %cst_31 = arith.constant dense<0.000000e+00> : vector<2x8xf32>
    %66 = vector.multi_reduction <add>, %65, %cst_31 [1] : vector<2x16x8xf32> to vector<2x8xf32>
    %c0_32 = arith.constant 0 : index
    %c0_33 = arith.constant 0 : index
    %c0_34 = arith.constant 0 : index
    %67 = vector.load %arg8[%c0_32, %c0_33, %c0_34] : memref<2x8x32xf32, #tpu.memory_space<vmem>>, vector<1x8x32xf32>
    %68 = vector.shape_cast %67 : vector<1x8x32xf32> to vector<8x32xf32>
    %cst_35 = arith.constant dense<0.000000e+00> : vector<2x32xf32>
    %69 = tpu.matmul %66, %68, %cst_35 {dimension_numbers = #tpu.dot_dimension_numbers<[1], [0], [0], [1], [0, 0, 1, 1], [], []>} : vector<2x8xf32>, vector<8x32xf32>, vector<2x32xf32> -> vector<2x32xf32>
    %70 = arith.addf %12, %69 : vector<2x32xf32>
    %c1_36 = arith.constant 1 : index
    %c0_37 = arith.constant 0 : index
    %c0_38 = arith.constant 0 : index
    %c0_39 = arith.constant 0 : index
    %71 = vector.load %arg0[%c1_36, %c0_37, %c0_38, %c0_39] : memref<2x2x16x2xf32, #tpu.memory_space<vmem>>, vector<1x2x16x2xf32>
    %72 = vector.shape_cast %71 : vector<1x2x16x2xf32> to vector<2x16x2xf32>
    %73 = vector.extract_strided_slice %72 {offsets = [0, 0, 0], sizes = [2, 16, 1], strides = [1, 1, 1]} : vector<2x16x2xf32> to vector<2x16x1xf32>
    %74 = vector.extract_strided_slice %72 {offsets = [0, 0, 1], sizes = [2, 16, 1], strides = [1, 1, 1]} : vector<2x16x2xf32> to vector<2x16x1xf32>
    %75 = vector.shape_cast %2 : vector<1x16xf32> to vector<1x1x16xf32>
    %76 = vector.broadcast %73 : vector<2x16x1xf32> to vector<2x16x16xf32>
    %77 = vector.broadcast %75 : vector<1x1x16xf32> to vector<2x16x16xf32>
    %78 = arith.mulf %76, %77 : vector<2x16x16xf32>
    %79 = vector.shape_cast %3 : vector<1x16xf32> to vector<1x1x16xf32>
    %80 = vector.broadcast %74 : vector<2x16x1xf32> to vector<2x16x16xf32>
    %81 = vector.broadcast %79 : vector<1x1x16xf32> to vector<2x16x16xf32>
    %82 = arith.mulf %80, %81 : vector<2x16x16xf32>
    %83 = arith.addf %78, %82 : vector<2x16x16xf32>
    %84 = vector.shape_cast %4 : vector<1x16xf32> to vector<1x1x16xf32>
    %85 = vector.broadcast %84 : vector<1x1x16xf32> to vector<2x16x16xf32>
    %86 = arith.addf %83, %85 : vector<2x16x16xf32>
    %cst_40 = arith.constant 0.000000e+00 : f32
    %87 = vector.broadcast %cst_40 : f32 to vector<2x16x16xf32>
    %88 = arith.maximumf %86, %87 : vector<2x16x16xf32>
    %89 = vector.shape_cast %5 : vector<1x16xf32> to vector<1x1x16xf32>
    %90 = vector.broadcast %89 : vector<1x1x16xf32> to vector<2x16x16xf32>
    %91 = arith.mulf %88, %90 : vector<2x16x16xf32>
    %cst_41 = arith.constant dense<0.000000e+00> : vector<2x16xf32>
    %92 = vector.multi_reduction <add>, %91, %cst_41 [2] : vector<2x16x16xf32> to vector<2x16xf32>
    %93 = vector.shape_cast %92 : vector<2x16xf32> to vector<2x16x1xf32>
    %94 = vector.shape_cast %6 : vector<1x1xf32> to vector<1x1x1xf32>
    %95 = vector.broadcast %94 : vector<1x1x1xf32> to vector<2x16x1xf32>
    %96 = arith.addf %93, %95 : vector<2x16x1xf32>
    %97 = arith.negf %96 : vector<2x16x1xf32>
    %98 = math.exp %97 : vector<2x16x1xf32>
    %cst_42 = arith.constant 1.000000e+00 : f32
    %99 = vector.broadcast %cst_42 : f32 to vector<2x16x1xf32>
    %100 = arith.addf %99, %98 : vector<2x16x1xf32>
    %101 = arith.divf %99, %100 : vector<2x16x1xf32>
    %102 = vector.shape_cast %0 : vector<1x8xf32> to vector<1x1x8xf32>
    %103 = vector.broadcast %73 : vector<2x16x1xf32> to vector<2x16x8xf32>
    %104 = vector.broadcast %102 : vector<1x1x8xf32> to vector<2x16x8xf32>
    %105 = arith.subf %103, %104 : vector<2x16x8xf32>
    %106 = arith.mulf %105, %105 : vector<2x16x8xf32>
    %107 = vector.shape_cast %1 : vector<1x8xf32> to vector<1x1x8xf32>
    %108 = vector.broadcast %74 : vector<2x16x1xf32> to vector<2x16x8xf32>
    %109 = vector.broadcast %107 : vector<1x1x8xf32> to vector<2x16x8xf32>
    %110 = arith.subf %108, %109 : vector<2x16x8xf32>
    %111 = arith.mulf %110, %110 : vector<2x16x8xf32>
    %112 = arith.addf %106, %111 : vector<2x16x8xf32>
    %cst_43 = arith.constant 0.000000e+00 : f32
    %113 = vector.broadcast %cst_43 : f32 to vector<2x16x8xf32>
    %114 = arith.subf %113, %112 : vector<2x16x8xf32>
    %cst_44 = arith.constant 5.000000e+01 : f32
    %115 = vector.broadcast %cst_44 : f32 to vector<2x16x8xf32>
    %116 = arith.mulf %114, %115 : vector<2x16x8xf32>
    %117 = math.exp %116 : vector<2x16x8xf32>
    %118 = vector.broadcast %101 : vector<2x16x1xf32> to vector<2x16x8xf32>
    %119 = arith.mulf %117, %118 : vector<2x16x8xf32>
    %c1_45 = arith.constant 1 : index
    %c0_46 = arith.constant 0 : index
    %c0_47 = arith.constant 0 : index
    %c0_48 = arith.constant 0 : index
    %120 = vector.load %arg1[%c1_45, %c0_46, %c0_47, %c0_48] : memref<2x2x16x1xf32, #tpu.memory_space<vmem>>, vector<1x2x16x1xf32>
    %121 = vector.shape_cast %120 : vector<1x2x16x1xf32> to vector<2x16x1xf32>
    %122 = vector.broadcast %121 : vector<2x16x1xf32> to vector<2x16x8xf32>
    %123 = arith.mulf %119, %122 : vector<2x16x8xf32>
    %cst_49 = arith.constant dense<0.000000e+00> : vector<2x8xf32>
    %124 = vector.multi_reduction <add>, %123, %cst_49 [1] : vector<2x16x8xf32> to vector<2x8xf32>
    %c1_50 = arith.constant 1 : index
    %c0_51 = arith.constant 0 : index
    %c0_52 = arith.constant 0 : index
    %125 = vector.load %arg8[%c1_50, %c0_51, %c0_52] : memref<2x8x32xf32, #tpu.memory_space<vmem>>, vector<1x8x32xf32>
    %126 = vector.shape_cast %125 : vector<1x8x32xf32> to vector<8x32xf32>
    %cst_53 = arith.constant dense<0.000000e+00> : vector<2x32xf32>
    %127 = tpu.matmul %124, %126, %cst_53 {dimension_numbers = #tpu.dot_dimension_numbers<[1], [0], [0], [1], [0, 0, 1, 1], [], []>} : vector<2x8xf32>, vector<8x32xf32>, vector<2x32xf32> -> vector<2x32xf32>
    %128 = arith.addf %70, %127 : vector<2x32xf32>
    %cst_54 = arith.constant 0.000000e+00 : f32
    %129 = vector.broadcast %cst_54 : f32 to vector<2x32xf32>
    %130 = arith.maximumf %128, %129 : vector<2x32xf32>
    %c0_55 = arith.constant 0 : index
    %c0_56 = arith.constant 0 : index
    %131 = vector.load %arg11[%c0_55, %c0_56] : memref<32x3xf32, #tpu.memory_space<vmem>>, vector<32x3xf32>
    %cst_57 = arith.constant dense<0.000000e+00> : vector<2x3xf32>
    %132 = tpu.matmul %130, %131, %cst_57 {dimension_numbers = #tpu.dot_dimension_numbers<[1], [0], [0], [1], [0, 0, 1, 1], [], []>} : vector<2x32xf32>, vector<32x3xf32>, vector<2x3xf32> -> vector<2x3xf32>
    %c0_58 = arith.constant 0 : index
    %c0_59 = arith.constant 0 : index
    %133 = vector.load %arg12[%c0_58, %c0_59] : memref<1x3xf32, #tpu.memory_space<vmem>>, vector<1x3xf32>
    %134 = vector.broadcast %133 : vector<1x3xf32> to vector<2x3xf32>
    %135 = arith.addf %132, %134 : vector<2x3xf32>
    %c0_60 = arith.constant 0 : index
    %c0_61 = arith.constant 0 : index
    %136 = vector.load %arg13[%c0_60, %c0_61] : memref<2x3xf32, #tpu.memory_space<vmem>>, vector<2x3xf32>
    tpu.vector_store %arg13[%c0_60, %c0_61], %135 {strides = array<i32>} : memref<2x3xf32, #tpu.memory_space<vmem>>, vector<2x3xf32>,
    return
  }
}

</mosaic_0001>

<llo_original>
// kernel: tpu_custom_call.1
$region0: #{tpu_custom_call.1}
  #allocation0 [shape = 'u32[]', space=smem, size = 0x4, offset = 0x4, fixed_abs, tag = 'smem constant byte address 0x4 - core index']
  #allocation1 [shape = 'u32[144,128]{1,0:T(1,128)}', space=vmem, size = 0x12000, scoped, tag = 'internal scratch']
  #allocation2 [shape = 'f32[1,1]{1,0:T(1,128)S(1)}', space=vmem, size = 0x200, scoped, tag = 'scoped memory for tpu_custom_call.1']
  %s0 = inlined_call_operand.vmem [shape: f32[2,2,16,2], index: 0, kind: input, shape index: {}]
  %s1 = inlined_call_operand.vmem [shape: f32[2,2,16,1], index: 1, kind: input, shape index: {}]
  %s2 = inlined_call_operand.vmem [shape: f32[2,8], index: 2, kind: input, shape index: {}]
  %s3 = inlined_call_operand.vmem [shape: f32[2,16], index: 3, kind: input, shape index: {}]
  %s4 = inlined_call_operand.vmem [shape: f32[1,16], index: 4, kind: input, shape index: {}]
  %s5 = inlined_call_operand.vmem [shape: f32[1,16], index: 5, kind: input, shape index: {}]
  %s6 = inlined_call_operand.<no memory space> [shape: f32[1,1], index: 6, kind: input, shape index: {}]
  %s7 = inlined_call_operand.vmem [shape: f32[2,4], index: 7, kind: input, shape index: {}]
  %s8 = inlined_call_operand.vmem [shape: f32[2,8,32], index: 8, kind: input, shape index: {}]
  %s9 = inlined_call_operand.vmem [shape: f32[4,32], index: 9, kind: input, shape index: {}]
  %s10 = inlined_call_operand.vmem [shape: f32[1,32], index: 10, kind: input, shape index: {}]
  %s11 = inlined_call_operand.vmem [shape: f32[32,3], index: 11, kind: input, shape index: {}]
  %s12 = inlined_call_operand.vmem [shape: f32[1,3], index: 12, kind: input, shape index: {}]
  %s13 = inlined_call_operand.hbm [shape: f32[2,3], index: 13, kind: output, shape index: {}]
  %s14 = sld [smem:[#allocation0]]
  $region62: #{tpu_custom_call.1} parent=0
    _
  %s16 = ssub.s32 1, %s14
  %s17 = scalar_select 0, %s16, %s14
  %v18 = vstv %s6
  %19 = vst [vmem:[#allocation2] sm:$0x1] %v18
  $region1: #{tpu_custom_call.1} parent=0
    #allocation3 [shape = 'u8[1024]{0}', space=vmem, size = 0x400, scoped, tag = 'output window, operand 0, single buffered']
    #allocation4 [shape = 's32[1]{0}', space=sflag, size = 0x4, scoped, tag = 'scoped memory for tpu_custom_call.1']
    %20 = vsyncpa [#allocation4], 0
    // Predicated region
    $region2: #{tpu_custom_call.1} parent=1 // pred_check
      _
    $region3: #{tpu_custom_call.1} parent=1 // pred_check_branch
      %22 = sbr.rel (0) target = $region5
    $region4: #{tpu_custom_call.1} parent=1 // pred_region
      _
    $region5: #{tpu_custom_call.1} parent=1 // pred_fallthru
      _
    // Predicated region
    $region6: #{tpu_custom_call.1} parent=1 // pred_check
      _
    $region7: #{tpu_custom_call.1} parent=1 // pred_check_branch
      %24 = sbr.rel (0) target = $region9
    $region8: #{tpu_custom_call.1} parent=1 // pred_region
      _
    $region9: #{tpu_custom_call.1} parent=1 // pred_fallthru
      _
    // Predicated region
    $region10: #{tpu_custom_call.1} parent=1 // pred_check
      _
    $region11: #{tpu_custom_call.1} parent=1 // pred_check_branch
      %26 = sbr.rel (0) target = $region13
    $region12: #{tpu_custom_call.1} parent=1 // pred_region
      _
    $region13: #{tpu_custom_call.1} parent=1 // pred_fallthru
      _
    // Predicated region
    $region14: #{tpu_custom_call.1} parent=1 // pred_check
      _
    $region15: #{tpu_custom_call.1} parent=1 // pred_check_branch
      %28 = sbr.rel (0) target = $region17
    $region16: #{tpu_custom_call.1} parent=1 // pred_region
      _
    $region17: #{tpu_custom_call.1} parent=1 // pred_fallthru
      _
    // Predicated region
    $region18: #{tpu_custom_call.1} parent=1 // pred_check
      _
    $region19: #{tpu_custom_call.1} parent=1 // pred_check_branch
      %30 = sbr.rel (0) target = $region21
    $region20: #{tpu_custom_call.1} parent=1 // pred_region
      _
    $region21: #{tpu_custom_call.1} parent=1 // pred_fallthru
      _
    // Predicated region
    $region22: #{tpu_custom_call.1} parent=1 // pred_check
      _
    $region23: #{tpu_custom_call.1} parent=1 // pred_check_branch
      %32 = sbr.rel (0) target = $region25
    $region24: #{tpu_custom_call.1} parent=1 // pred_region
      _
    $region25: #{tpu_custom_call.1} parent=1 // pred_fallthru
      _
    // Predicated region
    $region26: #{tpu_custom_call.1} parent=1 // pred_check
      _
    $region27: #{tpu_custom_call.1} parent=1 // pred_check_branch
      %34 = sbr.rel (0) target = $region29
    $region28: #{tpu_custom_call.1} parent=1 // pred_region
      _
    $region29: #{tpu_custom_call.1} parent=1 // pred_fallthru
      _
    // Predicated region
    $region30: #{tpu_custom_call.1} parent=1 // pred_check
      _
    $region31: #{tpu_custom_call.1} parent=1 // pred_check_branch
      %36 = sbr.rel (0) target = $region33
    $region32: #{tpu_custom_call.1} parent=1 // pred_region
      _
    $region33: #{tpu_custom_call.1} parent=1 // pred_fallthru
      _
    // Predicated region
    $region34: #{tpu_custom_call.1} parent=1 // pred_check
      _
    $region35: #{tpu_custom_call.1} parent=1 // pred_check_branch
      %38 = sbr.rel (0) target = $region37
    $region36: #{tpu_custom_call.1} parent=1 // pred_region
      _
    $region37: #{tpu_custom_call.1} parent=1 // pred_fallthru
      _
    // Predicated region
    $region38: #{tpu_custom_call.1} parent=1 // pred_check
      _
    $region39: #{tpu_custom_call.1} parent=1 // pred_check_branch
      %40 = sbr.rel (0) target = $region41
    $region40: #{tpu_custom_call.1} parent=1 // pred_region
      _
    $region41: #{tpu_custom_call.1} parent=1 // pred_fallthru
      _
    // Predicated region
    $region42: #{tpu_custom_call.1} parent=1 // pred_check
      _
    $region43: #{tpu_custom_call.1} parent=1 // pred_check_branch
      %42 = sbr.rel (0) target = $region45
    $region44: #{tpu_custom_call.1} parent=1 // pred_region
      _
    $region45: #{tpu_custom_call.1} parent=1 // pred_fallthru
      _
    // Predicated region
    $region46: #{tpu_custom_call.1} parent=1 // pred_check
      _
    $region47: #{tpu_custom_call.1} parent=1 // pred_check_branch
      %44 = sbr.rel (0) target = $region49
    $region48: #{tpu_custom_call.1} parent=1 // pred_region
      _
    $region49: #{tpu_custom_call.1} parent=1 // pred_fallthru
      _
    // Predicated region
    $region50: #{tpu_custom_call.1} parent=1 // pred_check
      _
    $region51: #{tpu_custom_call.1} parent=1 // pred_check_branch
      %46 = sbr.rel (0) target = $region53
    $region52: #{tpu_custom_call.1} parent=1 // pred_region
      _
    $region53: #{tpu_custom_call.1} parent=1 // pred_fallthru
      _
    %v47 = vld [vmem:[%s2] sm:$0x1]
    %v48 = vld [vmem:[%s2 + $0x1] sm:$0x1]
    %v49 = vld [vmem:[%s3] sm:$0x1]
    %v50 = vld [vmem:[%s3 + $0x1] sm:$0x1]
    %v51 = vld [vmem:[%s4] sm:$0x1]
    %v52 = vld [vmem:[%s5] sm:$0x1]
    %v53 = vld [vmem:[#allocation2] sm:$0x1]
    %v54 = vld [vmem:[%s7] sm:$0x3]
    %v55 = vld [vmem:[%s9] sm:$0xf]
    %v56 = vld [vmem:[%s10] sm:$0x1]
    %v58 = vlaneseq
    %v59 = vshrl.u32 %v58, 7
    %v60 = vsub.s32 0, %v59
    %v61 = vrot.slane %v56, %v60
    %vm63 = vcmask 31744
    %v65 = vsel %vm63, %v54, 0
    %vm67 = vcmask 1043456
    %v69 = vsel %vm67, %v55, 0
    %71 = vmatprep.subr.mxu0 0.0
    %72 = vmatpush1.msra.mxu0 0.0
    %73 = vmatprep.subr.mxu0 0.0
    %74 = vmatpush1.msra.mxu0 0.0
    %75 = vmatprep.subr.mxu0 0.0
    %76 = vmatpush1.msra.mxu0 0.0
    %77 = vmatprep.subr.mxu0 0.0
    %78 = vmatpush1.msra.mxu0 0.0
    %79 = vmatprep.subr.mxu0 0.0
    %80 = vmatpush1.msra.mxu0 0.0
    %81 = vmatprep.subr.mxu0 0.0
    %82 = vmatpush1.msra.mxu0 0.0
    %83 = vmatprep.subr.mxu0 0.0
    %84 = vmatpush1.msra.mxu0 0.0
    %85 = vmatprep.subr.mxu0 0.0
    %86 = vmatpush1.msra.mxu0 0.0
    %87 = vmatprep.subr.mxu0 0.0
    %88 = vmatpush1.msra.mxu0 0.0
    %89 = vmatprep.subr.mxu0 0.0
    %90 = vmatpush1.msra.mxu0 0.0
    %91 = vmatprep.subr.mxu0 0.0
    %92 = vmatpush1.msra.mxu0 0.0
    %93 = vmatprep.subr.mxu0 0.0
    %94 = vmatpush1.msra.mxu0 0.0
    %95 = vmatprep.subr.mxu0 0.0
    %96 = vmatpush1.msra.mxu0 0.0
    %97 = vmatprep.subr.mxu0 0.0
    %98 = vmatpush1.msra.mxu0 0.0
    %99 = vmatprep.subr.mxu0 0.0
    %100 = vmatpush1.msra.mxu0 0.0
    %101 = vmatprep.subr.mxu0 0.0
    %102 = vmatpush1.msra.mxu0 %v69
    %103 = vmatprep.subr.mxu0 0.0
    %104 = vmatpush2.msra.mxu0 0.0
    %105 = vmatprep.subr.mxu0 0.0
    %106 = vmatpush2.msra.mxu0 0.0
    %107 = vmatprep.subr.mxu0 0.0
    %108 = vmatpush2.msra.mxu0 0.0
    %109 = vmatprep.subr.mxu0 0.0
    %110 = vmatpush2.msra.mxu0 0.0
    %111 = vmatprep.subr.mxu0 0.0
    %112 = vmatpush2.msra.mxu0 0.0
    %113 = vmatprep.subr.mxu0 0.0
    %114 = vmatpush2.msra.mxu0 0.0
    %115 = vmatprep.subr.mxu0 0.0
    %116 = vmatpush2.msra.mxu0 0.0
    %117 = vmatprep.subr.mxu0 0.0
    %118 = vmatpush2.msra.mxu0 0.0
    %119 = vmatprep.subr.mxu0 0.0
    %120 = vmatpush2.msra.mxu0 0.0
    %121 = vmatprep.subr.mxu0 0.0
    %122 = vmatpush2.msra.mxu0 0.0
    %123 = vmatprep.subr.mxu0 0.0
    %124 = vmatpush2.msra.mxu0 0.0
    %125 = vmatprep.subr.mxu0 0.0
    %126 = vmatpush2.msra.mxu0 0.0
    %127 = vmatprep.subr.mxu0 0.0
    %128 = vmatpush2.msra.mxu0 0.0
    %129 = vmatprep.subr.mxu0 0.0
    %130 = vmatpush2.msra.mxu0 0.0
    %131 = vmatprep.subr.mxu0 0.0
    %132 = vmatpush2.msra.mxu0 0.0
    %133 = vmatprep.subr.mxu0 0.0
    %134 = vmatpush2.msra.mxu0 0.0
    %135 = vmatprep.mubr.f32.mxu0 0.0
    %136 = vmatmul.mubr.f32.gmra.mxu0 %v65
    %v137 = vpop.f32.mrf.mxu0
    %v138 = vadd.f32 %v61, %v137
    %v139 = vpop.f32.mrf.mxu0
    %140 = vdwg.mxu0
    %v141 = vld [vmem:[%s0] sm:$0xff]
    %v142 = vld [vmem:[%s0 + $0x8] sm:$0xff]
    %v143 = vld [vmem:[%s0 + $0x10] sm:$0xff]
    %v144 = vld [vmem:[%s0 + $0x18] sm:$0xff]
    %146 = vset.pattern.permute.xlu0 0
    %147 = vperm.xlu0 %146, %v141
    %v148 = vpop.permute.xlu0 %147
    %151 = vset.pattern.permute.xlu0 0
    %152 = vperm.xlu0 %151, %v142
    %v153 = vpop.permute.xlu0 %152
    %156 = vset.pattern.permute.xlu0 0
    %157 = vperm.xlu0 %156, %v143
    %v158 = vpop.permute.xlu0 %157
    %161 = vset.pattern.permute.xlu0 0
    %162 = vperm.xlu0 %161, %v144
    %v163 = vpop.permute.xlu0 %162
    %v165 = vlaneseq
    %v166 = vshrl.u32 %v165, 7
    %v167 = vsub.s32 0, %v166
    %v168 = vrot.slane %v49, %v167
    %v169 = vmul.f32 %v148, %v168
    %v170 = vmul.f32 %v153, %v168
    %v171 = vmul.f32 %v158, %v168
    %v172 = vmul.f32 %v163, %v168
    %173 = vset.pattern.permute.xlu0 1
    %174 = vperm.xlu0 %173, %v141
    %v175 = vpop.permute.xlu0 %174
    %177 = vset.pattern.permute.xlu0 1
    %178 = vperm.xlu0 %177, %v142
    %v179 = vpop.permute.xlu0 %178
    %181 = vset.pattern.permute.xlu0 1
    %182 = vperm.xlu0 %181, %v143
    %v183 = vpop.permute.xlu0 %182
    %185 = vset.pattern.permute.xlu0 1
    %186 = vperm.xlu0 %185, %v144
    %v187 = vpop.permute.xlu0 %186
    %v189 = vlaneseq
    %v190 = vshrl.u32 %v189, 7
    %v191 = vsub.s32 0, %v190
    %v192 = vrot.slane %v50, %v191
    %v193 = vmul.f32 %v175, %v192
    %v194 = vmul.f32 %v179, %v192
    %v195 = vmul.f32 %v183, %v192
    %v196 = vmul.f32 %v187, %v192
    %v197 = vadd.f32 %v169, %v193
    %v198 = vadd.f32 %v170, %v194
    %v199 = vadd.f32 %v171, %v195
    %v200 = vadd.f32 %v172, %v196
    %v202 = vlaneseq
    %v203 = vshrl.u32 %v202, 7
    %v204 = vsub.s32 0, %v203
    %v205 = vrot.slane %v51, %v204
    %v207 = vadd.f32 %v197, %v205
    %v208 = vadd.f32 %v198, %v205
    %v209 = vadd.f32 %v199, %v205
    %v210 = vadd.f32 %v200, %v205
    %v211 = vmax.f32 %v207, 0.0
    %v212 = vmax.f32 %v208, 0.0
    %v213 = vmax.f32 %v209, 0.0
    %v214 = vmax.f32 %v210, 0.0
    %v216 = vlaneseq
    %v217 = vshrl.u32 %v216, 7
    %v218 = vsub.s32 0, %v217
    %v219 = vrot.slane %v52, %v218
    %v221 = vmul.f32 %v211, %v219
    %v222 = vmul.f32 %v212, %v219
    %v223 = vmul.f32 %v213, %v219
    %v224 = vmul.f32 %v214, %v219
    %vm225 = vcmask 130048
    %v226 = vsel %vm225, %v221, 0.0
    %227 = vadd.xlane.f32.xlu0 %v226
    %v228 = vpop.xlane.xlu0 %227
    %v229 = vsel %vm225, %v222, 0.0
    %230 = vadd.xlane.f32.xlu0 %v229
    %v231 = vpop.xlane.xlu0 %230
    %v232 = vsel %vm225, %v223, 0.0
    %233 = vadd.xlane.f32.xlu0 %v232
    %v234 = vpop.xlane.xlu0 %233
    %v235 = vsel %vm225, %v224, 0.0
    %236 = vadd.xlane.f32.xlu0 %v235
    %v237 = vpop.xlane.xlu0 %236
    %v239 = vlaneseq
    %v240 = vshrl.u32 %v239, 7
    %v241 = vsub.s32 0, %v240
    %v242 = vrot.slane %v53, %v241
    %v244 = vadd.f32 %v228, %v242
    %v245 = vadd.f32 %v231, %v242
    %v246 = vadd.f32 %v234, %v242
    %v247 = vadd.f32 %v237, %v242
    %v248 = vxor.u32 %v244, 2147483648
    %v249 = vxor.u32 %v245, 2147483648
    %v250 = vxor.u32 %v246, 2147483648
    %v251 = vxor.u32 %v247, 2147483648
    %v252 = vmul.f32 %v248, 1.442695
    %v253 = vpow.pop %v252
    %v254 = vmul.f32 %v249, 1.442695
    %v255 = vpow.pop %v254
    %v256 = vmul.f32 %v250, 1.442695
    %v257 = vpow.pop %v256
    %v258 = vmul.f32 %v251, 1.442695
    %v259 = vpow.pop %v258
    %v260 = vadd.f32 %v253, 1.0
    %v261 = vadd.f32 %v255, 1.0
    %v262 = vadd.f32 %v257, 1.0
    %v263 = vadd.f32 %v259, 1.0
    %v264 = vrcp.pop %v260
    %v265 = vmul.f32 1.0, %v264
    %v266 = vrcp.pop %v261
    %v267 = vmul.f32 1.0, %v266
    %v268 = vrcp.pop %v262
    %v269 = vmul.f32 1.0, %v268
    %v270 = vrcp.pop %v263
    %v271 = vmul.f32 1.0, %v270
    %v272 = vlaneseq
    %v273 = vshrl.u32 %v272, 7
    %v274 = vsub.s32 0, %v273
    %v275 = vrot.slane %v47, %v274
    %v276 = vsub.f32 %v148, %v275
    %v277 = vsub.f32 %v153, %v275
    %v278 = vsub.f32 %v158, %v275
    %v279 = vsub.f32 %v163, %v275
    %v280 = vmul.f32 %v276, %v276
    %v281 = vmul.f32 %v277, %v277
    %v282 = vmul.f32 %v278, %v278
    %v283 = vmul.f32 %v279, %v279
    %v284 = vlaneseq
    %v285 = vshrl.u32 %v284, 7
    %v286 = vsub.s32 0, %v285
    %v287 = vrot.slane %v48, %v286
    %v288 = vsub.f32 %v175, %v287
    %v289 = vsub.f32 %v179, %v287
    %v290 = vsub.f32 %v183, %v287
    %v291 = vsub.f32 %v187, %v287
    %v292 = vmul.f32 %v288, %v288
    %v293 = vmul.f32 %v289, %v289
    %v294 = vmul.f32 %v290, %v290
    %v295 = vmul.f32 %v291, %v291
    %v296 = vadd.f32 %v280, %v292
    %v297 = vadd.f32 %v281, %v293
    %v298 = vadd.f32 %v282, %v294
    %v299 = vadd.f32 %v283, %v295
    %v300 = vsub.f32 0.0, %v296
    %v301 = vsub.f32 0.0, %v297
    %v302 = vsub.f32 0.0, %v298
    %v303 = vsub.f32 0.0, %v299
    %v304 = vmul.f32 %v300, 50.0
    %v305 = vmul.f32 %v301, 50.0
    %v306 = vmul.f32 %v302, 50.0
    %v307 = vmul.f32 %v303, 50.0
    %v308 = vmul.f32 %v304, 1.442695
    %v309 = vpow.pop %v308
    %v310 = vmul.f32 %v305, 1.442695
    %v311 = vpow.pop %v310
    %v312 = vmul.f32 %v306, 1.442695
    %v313 = vpow.pop %v312
    %v314 = vmul.f32 %v307, 1.442695
    %v315 = vpow.pop %v314
    %317 = vset.pattern.permute.xlu0 0
    %318 = vperm.xlu0 %317, %v265
    %v319 = vpop.permute.xlu0 %318
    %322 = vset.pattern.permute.xlu0 0
    %323 = vperm.xlu0 %322, %v267
    %v324 = vpop.permute.xlu0 %323
    %327 = vset.pattern.permute.xlu0 0
    %328 = vperm.xlu0 %327, %v269
    %v329 = vpop.permute.xlu0 %328
    %332 = vset.pattern.permute.xlu0 0
    %333 = vperm.xlu0 %332, %v271
    %v334 = vpop.permute.xlu0 %333
    %v336 = vmul.f32 %v309, %v319
    %v337 = vmul.f32 %v311, %v324
    %v338 = vmul.f32 %v313, %v329
    %v339 = vmul.f32 %v315, %v334
    %v340 = vld [vmem:[%s1] sm:$0xff]
    %v341 = vld [vmem:[%s1 + $0x8] sm:$0xff]
    %v342 = vld [vmem:[%s1 + $0x10] sm:$0xff]
    %v343 = vld [vmem:[%s1 + $0x18] sm:$0xff]
    %345 = vset.pattern.permute.xlu0 0
    %346 = vperm.xlu0 %345, %v340
    %v347 = vpop.permute.xlu0 %346
    %350 = vset.pattern.permute.xlu0 0
    %351 = vperm.xlu0 %350, %v341
    %v352 = vpop.permute.xlu0 %351
    %355 = vset.pattern.permute.xlu0 0
    %356 = vperm.xlu0 %355, %v342
    %v357 = vpop.permute.xlu0 %356
    %360 = vset.pattern.permute.xlu0 0
    %361 = vperm.xlu0 %360, %v343
    %v362 = vpop.permute.xlu0 %361
    %v364 = vmul.f32 %v336, %v347
    %v365 = vmul.f32 %v337, %v352
    %v366 = vmul.f32 %v338, %v357
    %v367 = vmul.f32 %v339, %v362
    %vm368 = vcmask 64512
    %v369 = vsel %vm368, %v364, 0.0
    %v370 = vsel %vm368, %v365, 0.0
    %v371 = vadd.f32 %v369, %v370
    %v372 = vrot.slane %v371, 4
    %v373 = vadd.f32 %v371, %v372
    %v374 = vrot.slane %v373, 2
    %v375 = vadd.f32 %v373, %v374
    %v376 = vrot.slane %v375, 1
    %v377 = vadd.f32 %v375, %v376
    %v378 = vsel %vm368, %v366, 0.0
    %v379 = vsel %vm368, %v367, 0.0
    %v380 = vadd.f32 %v378, %v379
    %v381 = vrot.slane %v380, 4
    %v382 = vadd.f32 %v380, %v381
    %v383 = vrot.slane %v382, 2
    %v384 = vadd.f32 %v382, %v383
    %v385 = vrot.slane %v384, 1
    %v386 = vadd.f32 %v384, %v385
    %v387 = vld [vmem:[%s8] sm:$0xff]
    %vm390 = vcmask 1041409
    %v391 = vsel %vm390, %v386, %v377
    %v392 = vsel %vm368, %v391, 0
    %394 = vmatprep.subr.mxu0 0.0
    %395 = vmatpush1.msra.mxu0 0.0
    %396 = vmatprep.subr.mxu0 0.0
    %397 = vmatpush1.msra.mxu0 0.0
    %398 = vmatprep.subr.mxu0 0.0
    %399 = vmatpush1.msra.mxu0 0.0
    %400 = vmatprep.subr.mxu0 0.0
    %401 = vmatpush1.msra.mxu0 0.0
    %402 = vmatprep.subr.mxu0 0.0
    %403 = vmatpush1.msra.mxu0 0.0
    %404 = vmatprep.subr.mxu0 0.0
    %405 = vmatpush1.msra.mxu0 0.0
    %406 = vmatprep.subr.mxu0 0.0
    %407 = vmatpush1.msra.mxu0 0.0
    %408 = vmatprep.subr.mxu0 0.0
    %409 = vmatpush1.msra.mxu0 0.0
    %410 = vmatprep.subr.mxu0 0.0
    %411 = vmatpush1.msra.mxu0 0.0
    %412 = vmatprep.subr.mxu0 0.0
    %413 = vmatpush1.msra.mxu0 0.0
    %414 = vmatprep.subr.mxu0 0.0
    %415 = vmatpush1.msra.mxu0 0.0
    %416 = vmatprep.subr.mxu0 0.0
    %417 = vmatpush1.msra.mxu0 0.0
    %418 = vmatprep.subr.mxu0 0.0
    %419 = vmatpush1.msra.mxu0 0.0
    %420 = vmatprep.subr.mxu0 0.0
    %421 = vmatpush1.msra.mxu0 0.0
    %422 = vmatprep.subr.mxu0 0.0
    %423 = vmatpush1.msra.mxu0 0.0
    %424 = vmatprep.subr.mxu0 0.0
    %425 = vmatpush1.msra.mxu0 %v387
    %426 = vmatprep.subr.mxu0 0.0
    %427 = vmatpush2.msra.mxu0 0.0
    %428 = vmatprep.subr.mxu0 0.0
    %429 = vmatpush2.msra.mxu0 0.0
    %430 = vmatprep.subr.mxu0 0.0
    %431 = vmatpush2.msra.mxu0 0.0
    %432 = vmatprep.subr.mxu0 0.0
    %433 = vmatpush2.msra.mxu0 0.0
    %434 = vmatprep.subr.mxu0 0.0
    %435 = vmatpush2.msra.mxu0 0.0
    %436 = vmatprep.subr.mxu0 0.0
    %437 = vmatpush2.msra.mxu0 0.0
    %438 = vmatprep.subr.mxu0 0.0
    %439 = vmatpush2.msra.mxu0 0.0
    %440 = vmatprep.subr.mxu0 0.0
    %441 = vmatpush2.msra.mxu0 0.0
    %442 = vmatprep.subr.mxu0 0.0
    %443 = vmatpush2.msra.mxu0 0.0
    %444 = vmatprep.subr.mxu0 0.0
    %445 = vmatpush2.msra.mxu0 0.0
    %446 = vmatprep.subr.mxu0 0.0
    %447 = vmatpush2.msra.mxu0 0.0
    %448 = vmatprep.subr.mxu0 0.0
    %449 = vmatpush2.msra.mxu0 0.0
    %450 = vmatprep.subr.mxu0 0.0
    %451 = vmatpush2.msra.mxu0 0.0
    %452 = vmatprep.subr.mxu0 0.0
    %453 = vmatpush2.msra.mxu0 0.0
    %454 = vmatprep.subr.mxu0 0.0
    %455 = vmatpush2.msra.mxu0 0.0
    %456 = vmatprep.subr.mxu0 0.0
    %457 = vmatpush2.msra.mxu0 0.0
    %458 = vmatprep.mubr.f32.mxu0 0.0
    %459 = vmatmul.mubr.f32.gmra.mxu0 %v392
    %v460 = vpop.f32.mrf.mxu0
    %v461 = vadd.f32 0.0, %v460
    %v462 = vpop.f32.mrf.mxu0
    %463 = vdwg.mxu0
    %v464 = vadd.f32 %v138, %v461
    %s465 = scalar_lea.vmem %s0, 32
    %v466 = vld [vmem:[%s465] sm:$0xff]
    %v467 = vld [vmem:[%s465 + $0x8] sm:$0xff]
    %v468 = vld [vmem:[%s465 + $0x10] sm:$0xff]
    %v469 = vld [vmem:[%s465 + $0x18] sm:$0xff]
    %471 = vset.pattern.permute.xlu0 0
    %472 = vperm.xlu0 %471, %v466
    %v473 = vpop.permute.xlu0 %472
    %476 = vset.pattern.permute.xlu0 0
    %477 = vperm.xlu0 %476, %v467
    %v478 = vpop.permute.xlu0 %477
    %481 = vset.pattern.permute.xlu0 0
    %482 = vperm.xlu0 %481, %v468
    %v483 = vpop.permute.xlu0 %482
    %486 = vset.pattern.permute.xlu0 0
    %487 = vperm.xlu0 %486, %v469
    %v488 = vpop.permute.xlu0 %487
    %v490 = vmul.f32 %v473, %v168
    %v491 = vmul.f32 %v478, %v168
    %v492 = vmul.f32 %v483, %v168
    %v493 = vmul.f32 %v488, %v168
    %494 = vset.pattern.permute.xlu0 1
    %495 = vperm.xlu0 %494, %v466
    %v496 = vpop.permute.xlu0 %495
    %498 = vset.pattern.permute.xlu0 1
    %499 = vperm.xlu0 %498, %v467
    %v500 = vpop.permute.xlu0 %499
    %502 = vset.pattern.permute.xlu0 1
    %503 = vperm.xlu0 %502, %v468
    %v504 = vpop.permute.xlu0 %503
    %506 = vset.pattern.permute.xlu0 1
    %507 = vperm.xlu0 %506, %v469
    %v508 = vpop.permute.xlu0 %507
    %v510 = vmul.f32 %v496, %v192
    %v511 = vmul.f32 %v500, %v192
    %v512 = vmul.f32 %v504, %v192
    %v513 = vmul.f32 %v508, %v192
    %v514 = vadd.f32 %v490, %v510
    %v515 = vadd.f32 %v491, %v511
    %v516 = vadd.f32 %v492, %v512
    %v517 = vadd.f32 %v493, %v513
    %v518 = vadd.f32 %v514, %v205
    %v519 = vadd.f32 %v515, %v205
    %v520 = vadd.f32 %v516, %v205
    %v521 = vadd.f32 %v517, %v205
    %v522 = vmax.f32 %v518, 0.0
    %v523 = vmax.f32 %v519, 0.0
    %v524 = vmax.f32 %v520, 0.0
    %v525 = vmax.f32 %v521, 0.0
    %v526 = vmul.f32 %v522, %v219
    %v527 = vmul.f32 %v523, %v219
    %v528 = vmul.f32 %v524, %v219
    %v529 = vmul.f32 %v525, %v219
    %v530 = vsel %vm225, %v526, 0.0
    %531 = vadd.xlane.f32.xlu0 %v530
    %v532 = vpop.xlane.xlu0 %531
    %v533 = vsel %vm225, %v527, 0.0
    %534 = vadd.xlane.f32.xlu0 %v533
    %v535 = vpop.xlane.xlu0 %534
    %v536 = vsel %vm225, %v528, 0.0
    %537 = vadd.xlane.f32.xlu0 %v536
    %v538 = vpop.xlane.xlu0 %537
    %v539 = vsel %vm225, %v529, 0.0
    %540 = vadd.xlane.f32.xlu0 %v539
    %v541 = vpop.xlane.xlu0 %540
    %v542 = vadd.f32 %v532, %v242
    %v543 = vadd.f32 %v535, %v242
    %v544 = vadd.f32 %v538, %v242
    %v545 = vadd.f32 %v541, %v242
    %v546 = vxor.u32 %v542, 2147483648
    %v547 = vxor.u32 %v543, 2147483648
    %v548 = vxor.u32 %v544, 2147483648
    %v549 = vxor.u32 %v545, 2147483648
    %v550 = vmul.f32 %v546, 1.442695
    %v551 = vpow.pop %v550
    %v552 = vmul.f32 %v547, 1.442695
    %v553 = vpow.pop %v552
    %v554 = vmul.f32 %v548, 1.442695
    %v555 = vpow.pop %v554
    %v556 = vmul.f32 %v549, 1.442695
    %v557 = vpow.pop %v556
    %v558 = vadd.f32 %v551, 1.0
    %v559 = vadd.f32 %v553, 1.0
    %v560 = vadd.f32 %v555, 1.0
    %v561 = vadd.f32 %v557, 1.0
    %v562 = vrcp.pop %v558
    %v563 = vmul.f32 1.0, %v562
    %v564 = vrcp.pop %v559
    %v565 = vmul.f32 1.0, %v564
    %v566 = vrcp.pop %v560
    %v567 = vmul.f32 1.0, %v566
    %v568 = vrcp.pop %v561
    %v569 = vmul.f32 1.0, %v568
    %v570 = vsub.f32 %v473, %v275
    %v571 = vsub.f32 %v478, %v275
    %v572 = vsub.f32 %v483, %v275
    %v573 = vsub.f32 %v488, %v275
    %v574 = vmul.f32 %v570, %v570
    %v575 = vmul.f32 %v571, %v571
    %v576 = vmul.f32 %v572, %v572
    %v577 = vmul.f32 %v573, %v573
    %v578 = vsub.f32 %v496, %v287
    %v579 = vsub.f32 %v500, %v287
    %v580 = vsub.f32 %v504, %v287
    %v581 = vsub.f32 %v508, %v287
    %v582 = vmul.f32 %v578, %v578
    %v583 = vmul.f32 %v579, %v579
    %v584 = vmul.f32 %v580, %v580
    %v585 = vmul.f32 %v581, %v581
    %v586 = vadd.f32 %v574, %v582
    %v587 = vadd.f32 %v575, %v583
    %v588 = vadd.f32 %v576, %v584
    %v589 = vadd.f32 %v577, %v585
    %v590 = vsub.f32 0.0, %v586
    %v591 = vsub.f32 0.0, %v587
    %v592 = vsub.f32 0.0, %v588
    %v593 = vsub.f32 0.0, %v589
    %v594 = vmul.f32 %v590, 50.0
    %v595 = vmul.f32 %v591, 50.0
    %v596 = vmul.f32 %v592, 50.0
    %v597 = vmul.f32 %v593, 50.0
    %v598 = vmul.f32 %v594, 1.442695
    %v599 = vpow.pop %v598
    %v600 = vmul.f32 %v595, 1.442695
    %v601 = vpow.pop %v600
    %v602 = vmul.f32 %v596, 1.442695
    %v603 = vpow.pop %v602
    %v604 = vmul.f32 %v597, 1.442695
    %v605 = vpow.pop %v604
    %607 = vset.pattern.permute.xlu0 0
    %608 = vperm.xlu0 %607, %v563
    %v609 = vpop.permute.xlu0 %608
    %612 = vset.pattern.permute.xlu0 0
    %613 = vperm.xlu0 %612, %v565
    %v614 = vpop.permute.xlu0 %613
    %617 = vset.pattern.permute.xlu0 0
    %618 = vperm.xlu0 %617, %v567
    %v619 = vpop.permute.xlu0 %618
    %622 = vset.pattern.permute.xlu0 0
    %623 = vperm.xlu0 %622, %v569
    %v624 = vpop.permute.xlu0 %623
    %v626 = vmul.f32 %v599, %v609
    %v627 = vmul.f32 %v601, %v614
    %v628 = vmul.f32 %v603, %v619
    %v629 = vmul.f32 %v605, %v624
    %s630 = scalar_lea.vmem %s1, 32
    %v631 = vld [vmem:[%s630] sm:$0xff]
    %v632 = vld [vmem:[%s630 + $0x8] sm:$0xff]
    %v633 = vld [vmem:[%s630 + $0x10] sm:$0xff]
    %v634 = vld [vmem:[%s630 + $0x18] sm:$0xff]
    %636 = vset.pattern.permute.xlu0 0
    %637 = vperm.xlu0 %636, %v631
    %v638 = vpop.permute.xlu0 %637
    %641 = vset.pattern.permute.xlu0 0
    %642 = vperm.xlu0 %641, %v632
    %v643 = vpop.permute.xlu0 %642
    %646 = vset.pattern.permute.xlu0 0
    %647 = vperm.xlu0 %646, %v633
    %v648 = vpop.permute.xlu0 %647
    %651 = vset.pattern.permute.xlu0 0
    %652 = vperm.xlu0 %651, %v634
    %v653 = vpop.permute.xlu0 %652
    %v655 = vmul.f32 %v626, %v638
    %v656 = vmul.f32 %v627, %v643
    %v657 = vmul.f32 %v628, %v648
    %v658 = vmul.f32 %v629, %v653
    %v659 = vsel %vm368, %v655, 0.0
    %v660 = vsel %vm368, %v656, 0.0
    %v661 = vadd.f32 %v659, %v660
    %v662 = vrot.slane %v661, 4
    %v663 = vadd.f32 %v661, %v662
    %v664 = vrot.slane %v663, 2
    %v665 = vadd.f32 %v663, %v664
    %v666 = vrot.slane %v665, 1
    %v667 = vadd.f32 %v665, %v666
    %v668 = vsel %vm368, %v657, 0.0
    %v669 = vsel %vm368, %v658, 0.0
    %v670 = vadd.f32 %v668, %v669
    %v671 = vrot.slane %v670, 4
    %v672 = vadd.f32 %v670, %v671
    %v673 = vrot.slane %v672, 2
    %v674 = vadd.f32 %v672, %v673
    %v675 = vrot.slane %v674, 1
    %v676 = vadd.f32 %v674, %v675
    %s677 = scalar_lea.vmem %s8, 8
    %v678 = vld [vmem:[%s677] sm:$0xff]
    %v681 = vsel %vm390, %v676, %v667
    %v682 = vsel %vm368, %v681, 0
    %684 = vmatprep.subr.mxu0 0.0
    %685 = vmatpush1.msra.mxu0 0.0
    %686 = vmatprep.subr.mxu0 0.0
    %687 = vmatpush1.msra.mxu0 0.0
    %688 = vmatprep.subr.mxu0 0.0
    %689 = vmatpush1.msra.mxu0 0.0
    %690 = vmatprep.subr.mxu0 0.0
    %691 = vmatpush1.msra.mxu0 0.0
    %692 = vmatprep.subr.mxu0 0.0
    %693 = vmatpush1.msra.mxu0 0.0
    %694 = vmatprep.subr.mxu0 0.0
    %695 = vmatpush1.msra.mxu0 0.0
    %696 = vmatprep.subr.mxu0 0.0
    %697 = vmatpush1.msra.mxu0 0.0
    %698 = vmatprep.subr.mxu0 0.0
    %699 = vmatpush1.msra.mxu0 0.0
    %700 = vmatprep.subr.mxu0 0.0
    %701 = vmatpush1.msra.mxu0 0.0
    %702 = vmatprep.subr.mxu0 0.0
    %703 = vmatpush1.msra.mxu0 0.0
    %704 = vmatprep.subr.mxu0 0.0
    %705 = vmatpush1.msra.mxu0 0.0
    %706 = vmatprep.subr.mxu0 0.0
    %707 = vmatpush1.msra.mxu0 0.0
    %708 = vmatprep.subr.mxu0 0.0
    %709 = vmatpush1.msra.mxu0 0.0
    %710 = vmatprep.subr.mxu0 0.0
    %711 = vmatpush1.msra.mxu0 0.0
    %712 = vmatprep.subr.mxu0 0.0
    %713 = vmatpush1.msra.mxu0 0.0
    %714 = vmatprep.subr.mxu0 0.0
    %715 = vmatpush1.msra.mxu0 %v678
    %716 = vmatprep.subr.mxu0 0.0
    %717 = vmatpush2.msra.mxu0 0.0
    %718 = vmatprep.subr.mxu0 0.0
    %719 = vmatpush2.msra.mxu0 0.0
    %720 = vmatprep.subr.mxu0 0.0
    %721 = vmatpush2.msra.mxu0 0.0
    %722 = vmatprep.subr.mxu0 0.0
    %723 = vmatpush2.msra.mxu0 0.0
    %724 = vmatprep.subr.mxu0 0.0
    %725 = vmatpush2.msra.mxu0 0.0
    %726 = vmatprep.subr.mxu0 0.0
    %727 = vmatpush2.msra.mxu0 0.0
    %728 = vmatprep.subr.mxu0 0.0
    %729 = vmatpush2.msra.mxu0 0.0
    %730 = vmatprep.subr.mxu0 0.0
    %731 = vmatpush2.msra.mxu0 0.0
    %732 = vmatprep.subr.mxu0 0.0
    %733 = vmatpush2.msra.mxu0 0.0
    %734 = vmatprep.subr.mxu0 0.0
    %735 = vmatpush2.msra.mxu0 0.0
    %736 = vmatprep.subr.mxu0 0.0
    %737 = vmatpush2.msra.mxu0 0.0
    %738 = vmatprep.subr.mxu0 0.0
    %739 = vmatpush2.msra.mxu0 0.0
    %740 = vmatprep.subr.mxu0 0.0
    %741 = vmatpush2.msra.mxu0 0.0
    %742 = vmatprep.subr.mxu0 0.0
    %743 = vmatpush2.msra.mxu0 0.0
    %744 = vmatprep.subr.mxu0 0.0
    %745 = vmatpush2.msra.mxu0 0.0
    %746 = vmatprep.subr.mxu0 0.0
    %747 = vmatpush2.msra.mxu0 0.0
    %748 = vmatprep.mubr.f32.mxu0 0.0
    %749 = vmatmul.mubr.f32.gmra.mxu0 %v682
    %v750 = vpop.f32.mrf.mxu0
    %v751 = vadd.f32 0.0, %v750
    %v752 = vpop.f32.mrf.mxu0
    %753 = vdwg.mxu0
    %v754 = vadd.f32 %v464, %v751
    %v755 = vmax.f32 %v754, 0.0
    %v756 = vld [vmem:[%s11] sm:$0xff]
    %v757 = vld [vmem:[%s11 + $0x8] sm:$0xff]
    %v758 = vld [vmem:[%s11 + $0x10] sm:$0xff]
    %v759 = vld [vmem:[%s11 + $0x18] sm:$0xff]
    %v760 = vld [vmem:[%s12] sm:$0x1]
    %v762 = vlaneseq
    %v763 = vshrl.u32 %v762, 7
    %v764 = vsub.s32 0, %v763
    %v765 = vrot.slane %v760, %v764
    %vm767 = vcmask 261120
    %v769 = vsel %vm767, %v755, 0
    %771 = vmatprep.subr.mxu0 0.0
    %772 = vmatpush1.msra.mxu0 0.0
    %773 = vmatprep.subr.mxu0 0.0
    %774 = vmatpush1.msra.mxu0 0.0
    %775 = vmatprep.subr.mxu0 0.0
    %776 = vmatpush1.msra.mxu0 0.0
    %777 = vmatprep.subr.mxu0 0.0
    %778 = vmatpush1.msra.mxu0 0.0
    %779 = vmatprep.subr.mxu0 0.0
    %780 = vmatpush1.msra.mxu0 0.0
    %781 = vmatprep.subr.mxu0 0.0
    %782 = vmatpush1.msra.mxu0 0.0
    %783 = vmatprep.subr.mxu0 0.0
    %784 = vmatpush1.msra.mxu0 0.0
    %785 = vmatprep.subr.mxu0 0.0
    %786 = vmatpush1.msra.mxu0 0.0
    %787 = vmatprep.subr.mxu0 0.0
    %788 = vmatpush1.msra.mxu0 0.0
    %789 = vmatprep.subr.mxu0 0.0
    %790 = vmatpush1.msra.mxu0 0.0
    %791 = vmatprep.subr.mxu0 0.0
    %792 = vmatpush1.msra.mxu0 0.0
    %793 = vmatprep.subr.mxu0 0.0
    %794 = vmatpush1.msra.mxu0 0.0
    %795 = vmatprep.subr.mxu0 0.0
    %796 = vmatpush1.msra.mxu0 %v759
    %797 = vmatprep.subr.mxu0 0.0
    %798 = vmatpush1.msra.mxu0 %v758
    %799 = vmatprep.subr.mxu0 0.0
    %800 = vmatpush1.msra.mxu0 %v757
    %801 = vmatprep.subr.mxu0 0.0
    %802 = vmatpush1.msra.mxu0 %v756
    %803 = vmatprep.subr.mxu0 0.0
    %804 = vmatpush2.msra.mxu0 0.0
    %805 = vmatprep.subr.mxu0 0.0
    %806 = vmatpush2.msra.mxu0 0.0
    %807 = vmatprep.subr.mxu0 0.0
    %808 = vmatpush2.msra.mxu0 0.0
    %809 = vmatprep.subr.mxu0 0.0
    %810 = vmatpush2.msra.mxu0 0.0
    %811 = vmatprep.subr.mxu0 0.0
    %812 = vmatpush2.msra.mxu0 0.0
    %813 = vmatprep.subr.mxu0 0.0
    %814 = vmatpush2.msra.mxu0 0.0
    %815 = vmatprep.subr.mxu0 0.0
    %816 = vmatpush2.msra.mxu0 0.0
    %817 = vmatprep.subr.mxu0 0.0
    %818 = vmatpush2.msra.mxu0 0.0
    %819 = vmatprep.subr.mxu0 0.0
    %820 = vmatpush2.msra.mxu0 0.0
    %821 = vmatprep.subr.mxu0 0.0
    %822 = vmatpush2.msra.mxu0 0.0
    %823 = vmatprep.subr.mxu0 0.0
    %824 = vmatpush2.msra.mxu0 0.0
    %825 = vmatprep.subr.mxu0 0.0
    %826 = vmatpush2.msra.mxu0 0.0
    %827 = vmatprep.subr.mxu0 0.0
    %828 = vmatpush2.msra.mxu0 0.0
    %829 = vmatprep.subr.mxu0 0.0
    %830 = vmatpush2.msra.mxu0 0.0
    %831 = vmatprep.subr.mxu0 0.0
    %832 = vmatpush2.msra.mxu0 0.0
    %833 = vmatprep.subr.mxu0 0.0
    %834 = vmatpush2.msra.mxu0 0.0
    %835 = vmatprep.mubr.f32.mxu0 0.0
    %836 = vmatmul.mubr.f32.gmra.mxu0 %v769
    %v837 = vpop.f32.mrf.mxu0
    %v838 = vadd.f32 %v765, %v837
    %v839 = vpop.f32.mrf.mxu0
    %840 = vdwg.mxu0
    %vm841 = vcmask 17408
    %842 = vst.msk [vmem:[#allocation3] sm:$0x3] %vm841, %v838
    // Predicated region
    $region54: #{tpu_custom_call.1} parent=1 // pred_check
      _
    $region55: #{tpu_custom_call.1} parent=1 // pred_check_branch
      %844 = sbr.rel (0) target = $region57
    $region56: #{tpu_custom_call.1} parent=1 // pred_region
      %s846 = ssub.s32 32, 32
      %847 = vsyncadd [#allocation4], %s846
      %s849 = sshll.u32 [#allocation3], 4
      %s850 = int_to_ptr.vmem [resolvable:$true] %s849
      %852 = dma.vmem_to_hbm [thread:$0]  %s850, 32, %s13, [#allocation4]
    $region57: #{tpu_custom_call.1} parent=1 // pred_fallthru
      _
    // Predicated region
    $region58: #{tpu_custom_call.1} parent=1 // pred_check
      _
    $region59: #{tpu_custom_call.1} parent=1 // pred_check_branch
      %854 = sbr.rel (0) target = $region61
    $region60: #{tpu_custom_call.1} parent=1 // pred_region
      %855 = dma.done [#allocation4], 32
    $region61: #{tpu_custom_call.1} parent=1 // pred_fallthru
      _
    %856 = vsyncpa [#allocation4], 1

</llo_original>
